<compile_context>
chip_gen: v7x
topology: tpu7x:2x2x1
jax: 0.10.0
libtpu: 0.0.40
codegen_flags: <defaults>
</compile_context>

<pallas_src>
import jax
import jax.numpy as jnp
from jax.experimental import pallas as pl
from jax.experimental.pallas import tpu as pltpu

# Module constants (reference sets self.a = b, so a == b == 0.5).
_A = 0.5
_B = 0.5
_C = 0.5
_D = 1.5
_E = 2.0

_LANES = 1024                  # lane-dense slab width (multiple of 128)
_MAX_BLOCK_ROWS = 1024         # 1024x1024 f32 tile = 4 MiB; 16 MiB in+out double-buffered
_VMEM_LIMIT = 32 * 1024 * 1024 # fits v5e/v6e (128 MiB phys) and v7x (64 MiB phys)


def _aria2_gompertz_kernel(x_ref, o_ref):
    x = x_ref[...].astype(jnp.float32)
    # t = exp(-c*x) with c = 0.5 ; reused for everything below.
    t = jnp.exp(-_C * x)
    # gompertz = a * exp(-b * t)
    gompertz = _A * jnp.exp(-_B * t)
    # exp(-x) = t*t ; exp(-x)**1.5 = t*t*t  (VPU muls, no pow -> log+exp)
    t2 = t * t
    base = 1.0 + t2 * t
    # base ** (-2.0) == 1 / (base*base)  (exact divide for tight parity)
    inv = 1.0 / (base * base)
    o_ref[...] = (gompertz * x * inv).astype(o_ref.dtype)


def _round_up(v, m):
    return ((v + m - 1) // m) * m


def _run_slab(slab):
    """Run the kernel on a (rows, _LANES) slab. Rows need not divide the block."""
    rows, lanes = slab.shape
    if rows <= 16:
        # Single full-extent block (block dim == array dim is always legal).
        block_rows = rows
    else:
        # >= 2 blocks so both v7x TensorCores get work; tile capped at 4 MiB,
        # rounded to a multiple of 16 rows (free for f32, optimal for bf16).
        half = _round_up(pl.cdiv(rows, 2), 16)
        block_rows = min(_MAX_BLOCK_ROWS, half)
    grid = (pl.cdiv(rows, block_rows),)

    n = rows * lanes
    itemsize = jnp.dtype(slab.dtype).itemsize
    cost = pl.CostEstimate(flops=10 * n,
                           transcendentals=2 * n,
                           bytes_accessed=2 * n * itemsize)

    return pl.pallas_call(
        _aria2_gompertz_kernel,
        out_shape=jax.ShapeDtypeStruct((rows, lanes), slab.dtype),
        grid=grid,
        in_specs=[pl.BlockSpec((block_rows, lanes), lambda i: (i, 0))],
        out_specs=pl.BlockSpec((block_rows, lanes), lambda i: (i, 0)),
        compiler_params=pltpu.CompilerParams(
            dimension_semantics=("parallel",),
            vmem_limit_bytes=_VMEM_LIMIT),
        cost_estimate=cost,
    )(slab)


def _jnp_ref(x):
    gompertz = _A * jnp.exp(-_B * jnp.exp(-_C * x))
    aria2 = x * (1.0 + jnp.exp(-x) ** _D) ** (-_E)
    return gompertz * aria2


def aria2_gompertz(x):
    """Apply the Aria2*Gompertz activation elementwise. Any shape (NCHW OK)."""
    orig_shape = x.shape
    n = x.size
    flat = x.reshape(-1)

    n_main = (n // _LANES) * _LANES
    if n_main == n:
        # Fast path: free reshape, no pad/slice; partial boundary row-blocks
        # (rows % block_rows != 0) are masked by Pallas automatically.
        out = _run_slab(flat.reshape(n // _LANES, _LANES))
        return out.reshape(orig_shape)

    if n_main == 0:
        # Tiny input (< 1024 elems): launch overhead dominates -> plain jnp.
        return _jnp_ref(x)

    # Unaligned size: kernel on the lane-aligned prefix, plain jnp on the
    # <1024-element tail. Avoids the pad + slice full-HBM round trips.
    main_out = _run_slab(flat[:n_main].reshape(n_main // _LANES, _LANES))
    tail_out = _jnp_ref(flat[n_main:])
    return jnp.concatenate([main_out.reshape(-1), tail_out]).reshape(orig_shape)


if __name__ == "__main__":
    key = jax.random.PRNGKey(0)
    # NCHW input, small shape consistent with a conv-style module input.
    x = jax.random.normal(key, (2, 4, 16, 16), dtype=jnp.float32)

    y = aria2_gompertz(x)
    y = jax.block_until_ready(y)

    y_ref = _jnp_ref(x)
    assert y.shape == x.shape and y.dtype == x.dtype
    assert jnp.allclose(y, y_ref, atol=1e-6, rtol=1e-5), "mismatch vs reference"

    print("KERNEL_OK")
</pallas_src>

<mosaic_0001>
module attributes {stable_mosaic.version = 11 : i64} {
  func.func @_aria2_gompertz_kernel(%arg0: i32, %arg1: memref<2x1024xf32, #tpu.memory_space<vmem>>, %arg2: memref<2x1024xf32, #tpu.memory_space<vmem>>) attributes {dimension_semantics = [#tpu.dimension_semantics<parallel>], iteration_bounds = array<i64: 1>, scalar_prefetch = 0 : i64, scratch_operands = 0 : i64, tpu.core_type = #tpu.core_type<tc>, window_params = [{transform_indices = @transform_0, window_bounds = array<i64: 2, 1024>}, {transform_indices = @transform_1, window_bounds = array<i64: 2, 1024>}]} {
    %c0 = arith.constant 0 : index
    %c0_0 = arith.constant 0 : index
    %0 = vector.load %arg1[%c0, %c0_0] : memref<2x1024xf32, #tpu.memory_space<vmem>>, vector<2x1024xf32>
    %cst = arith.constant -5.000000e-01 : f32
    %1 = vector.broadcast %cst : f32 to vector<2x1024xf32>
    %2 = arith.mulf %1, %0 : vector<2x1024xf32>
    %3 = math.exp %2 : vector<2x1024xf32>
    %cst_1 = arith.constant -5.000000e-01 : f32
    %4 = vector.broadcast %cst_1 : f32 to vector<2x1024xf32>
    %5 = arith.mulf %4, %3 : vector<2x1024xf32>
    %6 = math.exp %5 : vector<2x1024xf32>
    %cst_2 = arith.constant 5.000000e-01 : f32
    %7 = vector.broadcast %cst_2 : f32 to vector<2x1024xf32>
    %8 = arith.mulf %7, %6 : vector<2x1024xf32>
    %9 = arith.mulf %3, %3 : vector<2x1024xf32>
    %10 = arith.mulf %9, %3 : vector<2x1024xf32>
    %cst_3 = arith.constant 1.000000e+00 : f32
    %11 = vector.broadcast %cst_3 : f32 to vector<2x1024xf32>
    %12 = arith.addf %11, %10 : vector<2x1024xf32>
    %13 = arith.mulf %12, %12 : vector<2x1024xf32>
    %cst_4 = arith.constant 1.000000e+00 : f32
    %14 = vector.broadcast %cst_4 : f32 to vector<2x1024xf32>
    %15 = arith.divf %14, %13 : vector<2x1024xf32>
    %16 = arith.mulf %8, %0 : vector<2x1024xf32>
    %17 = arith.mulf %16, %15 : vector<2x1024xf32>
    %c0_5 = arith.constant 0 : index
    %c0_6 = arith.constant 0 : index
    %18 = vector.load %arg2[%c0_5, %c0_6] : memref<2x1024xf32, #tpu.memory_space<vmem>>, vector<2x1024xf32>
    tpu.vector_store %arg2[%c0_5, %c0_6], %17 {strides = array<i32>} : memref<2x1024xf32, #tpu.memory_space<vmem>>, vector<2x1024xf32>,
    return
  }
  func.func @transform_0(%arg0: i32) -> (i32, i32) {
    %c0_i32 = arith.constant 0 : i32
    %c0_i32_0 = arith.constant 0 : i32
    return %arg0, %c0_i32 : i32, i32
  }
  func.func @transform_1(%arg0: i32) -> (i32, i32) {
    %c0_i32 = arith.constant 0 : i32
    %c0_i32_0 = arith.constant 0 : i32
    return %arg0, %c0_i32 : i32, i32
  }
}

</mosaic_0001>

<llo_original>
// kernel: tpu_custom_call.1
$region0: #{tpu_custom_call.1}
  #allocation0 [shape = 'u32[]', space=smem, size = 0x4, offset = 0x4, fixed_abs, tag = 'smem constant byte address 0x4 - core index']
  #allocation1 [shape = 'u32[144,128]{1,0:T(1,128)}', space=vmem, size = 0x12000, scoped, tag = 'internal scratch']
  %s0 = inlined_call_operand.hbm [shape: f32[2,1024], index: 0, kind: input, shape index: {}]
  %s1 = inlined_call_operand.hbm [shape: f32[2,1024], index: 1, kind: output, shape index: {}]
  %s2 = sld [smem:[#allocation0]]
  $region18: #{tpu_custom_call.1} parent=0
    _
  %s4 = ssub.s32 1, %s2
  %s5 = scalar_select 0, %s4, %s2
  $region1: #{tpu_custom_call.1} parent=0
    #allocation2 [shape = 'u8[8192]{0}', space=vmem, size = 0x2000, scoped, tag = 'input window, operand 0, single buffered']
    #allocation3 [shape = 's32[1]{0}', space=sflag, size = 0x4, scoped, tag = 'scoped memory for tpu_custom_call.1']
    #allocation4 [shape = 's32[1]{0}', space=sflag, size = 0x4, scoped, tag = 'scoped memory for tpu_custom_call.1']
    #allocation5 [shape = 'u8[8192]{0}', space=vmem, size = 0x2000, scoped, tag = 'output window, operand 0, single buffered']
    %6 = vsyncpa [#allocation3], 0
    %7 = vsyncpa [#allocation4], 0
    // Predicated region
    $region2: #{tpu_custom_call.1} parent=1 // pred_check
      _
    $region3: #{tpu_custom_call.1} parent=1 // pred_check_branch
      %9 = sbr.rel (0) target = $region5
    $region4: #{tpu_custom_call.1} parent=1 // pred_region
      %s11 = ssub.s32 256, 256
      %12 = vsyncadd [#allocation3], %s11
      %s14 = sshll.u32 [#allocation2], 4
      %s15 = int_to_ptr.vmem [resolvable:$true] %s14
      %17 = dma.hbm_to_vmem [thread:$0]  %s0, 256, %s15, [#allocation3]
    $region5: #{tpu_custom_call.1} parent=1 // pred_fallthru
      _
    // Predicated region
    $region6: #{tpu_custom_call.1} parent=1 // pred_check
      _
    $region7: #{tpu_custom_call.1} parent=1 // pred_check_branch
      %19 = sbr.rel (0) target = $region9
    $region8: #{tpu_custom_call.1} parent=1 // pred_region
      %20 = dma.done [#allocation3], 256
    $region9: #{tpu_custom_call.1} parent=1 // pred_fallthru
      _
    %v21 = vld [vmem:[#allocation2] sm:$0xff]
    %v22 = vld [vmem:[#allocation2 + $0x8] sm:$0xff]
    %v23 = vmul.f32 %v21, -0.5
    %v24 = vmul.f32 %v22, -0.5
    %v25 = vmul.f32 %v23, 1.442695
    %v26 = vpow.pop %v25
    %v27 = vmul.f32 %v24, 1.442695
    %v28 = vpow.pop %v27
    %v29 = vmul.f32 %v26, -0.5
    %v30 = vmul.f32 %v28, -0.5
    %v31 = vmul.f32 %v29, 1.442695
    %v32 = vpow.pop %v31
    %v33 = vmul.f32 %v30, 1.442695
    %v34 = vpow.pop %v33
    %v35 = vmul.f32 %v32, 0.5
    %v36 = vmul.f32 %v34, 0.5
    %v37 = vmul.f32 %v26, %v26
    %v38 = vmul.f32 %v28, %v28
    %v39 = vmul.f32 %v37, %v26
    %v40 = vmul.f32 %v38, %v28
    %v41 = vadd.f32 %v39, 1.0
    %v42 = vadd.f32 %v40, 1.0
    %v43 = vmul.f32 %v41, %v41
    %v44 = vmul.f32 %v42, %v42
    %v45 = vrcp.pop %v43
    %v46 = vmul.f32 1.0, %v45
    %v47 = vrcp.pop %v44
    %v48 = vmul.f32 1.0, %v47
    %v49 = vmul.f32 %v35, %v21
    %v50 = vmul.f32 %v36, %v22
    %v51 = vmul.f32 %v49, %v46
    %v52 = vmul.f32 %v50, %v48
    %53 = vst [vmem:[#allocation5] sm:$0xff] %v51
    %54 = vst [vmem:[#allocation5 + $0x8] sm:$0xff] %v52
    // Predicated region
    $region10: #{tpu_custom_call.1} parent=1 // pred_check
      _
    $region11: #{tpu_custom_call.1} parent=1 // pred_check_branch
      %56 = sbr.rel (0) target = $region13
    $region12: #{tpu_custom_call.1} parent=1 // pred_region
      %s58 = ssub.s32 256, 256
      %59 = vsyncadd [#allocation4], %s58
      %s61 = sshll.u32 [#allocation5], 4
      %s62 = int_to_ptr.vmem [resolvable:$true] %s61
      %64 = dma.vmem_to_hbm [thread:$0]  %s62, 256, %s1, [#allocation4]
    $region13: #{tpu_custom_call.1} parent=1 // pred_fallthru
      _
    // Predicated region
    $region14: #{tpu_custom_call.1} parent=1 // pred_check
      _
    $region15: #{tpu_custom_call.1} parent=1 // pred_check_branch
      %66 = sbr.rel (0) target = $region17
    $region16: #{tpu_custom_call.1} parent=1 // pred_region
      %67 = dma.done [#allocation4], 256
    $region17: #{tpu_custom_call.1} parent=1 // pred_fallthru
      _
    %68 = vsyncpa [#allocation3], 1
    %69 = vsyncpa [#allocation4], 1

</llo_original>
